<compile_context>
chip_gen: v7x
topology: tpu7x:2x2x1
jax: 0.10.0
libtpu: 0.0.40
codegen_flags: <defaults>
</compile_context>

<pallas_src>
import functools
import math

import jax
import jax.numpy as jnp
from jax.experimental import pallas as pl
from jax.experimental.pallas import tpu as pltpu

_LANES = 128
_MAX_TILE_ROWS = 1024                    # ~HBM-roofline plateau on v6e; safe on v5e/v7x
_TILE_VMEM_BUDGET = 24 * 1024 * 1024     # budget for double-buffered in+out tiles
_VMEM_LIMIT_BYTES = 48 * 1024 * 1024     # raised scoped-VMEM limit (< v7x 64 MiB physical)


def _layernorm_kernel(x_ref, scale_ref, shift_ref, o_ref, *, inv_d, eps):
    """Plain LayerNorm on a (tile_rows, D) block; D is a full lane row."""
    x = x_ref[...].astype(jnp.float32)
    mean = jnp.sum(x, axis=-1, keepdims=True) * inv_d
    centered = x - mean
    var = jnp.sum(centered * centered, axis=-1, keepdims=True) * inv_d  # unbiased=False
    inv_std = jax.lax.rsqrt(var + eps)
    o_ref[...] = (centered * inv_std * scale_ref[...] + shift_ref[...]).astype(o_ref.dtype)


def _layernorm_packed_kernel(x_ref, scale_ref, shift_ref, mask_ref, o_ref, *,
                             pack, inv_d, eps):
    """Lane-dense LayerNorm for small D: block is (tile_rows, 128); each physical
    row holds `pack` logical rows of width D = 128 // pack. Segment statistics
    are computed exactly via one-hot segment masks (all 128 lanes stay live)."""
    x = x_ref[...].astype(jnp.float32)
    masks = mask_ref[...]                                   # (pack, 128) f32 one-hot
    mean = jnp.zeros_like(x)
    for s in range(pack):                                   # static unroll, pack <= 16
        m = masks[s:s + 1, :]                               # (1, 128)
        seg_sum = jnp.sum(x * m, axis=-1, keepdims=True)    # (tile_rows, 1), exact f32
        mean = mean + seg_sum * m
    mean = mean * inv_d
    centered = x - mean
    c2 = centered * centered
    var = jnp.zeros_like(x)
    for s in range(pack):
        m = masks[s:s + 1, :]
        seg_sum = jnp.sum(c2 * m, axis=-1, keepdims=True)
        var = var + seg_sum * m
    var = var * inv_d
    inv_std = jax.lax.rsqrt(var + eps)
    o_ref[...] = (centered * inv_std * scale_ref[...] + shift_ref[...]).astype(o_ref.dtype)


def _pick_tile_rows(rows, row_bytes, granule):
    """Largest row tile whose double-buffered (in + out) copies fit the VMEM budget."""
    by_vmem = _TILE_VMEM_BUDGET // (2 * row_bytes)
    tile = int(min(_MAX_TILE_ROWS, max(granule, by_vmem)))
    tile = (tile // granule) * granule
    if rows <= tile:
        if rows >= 256:
            # Split into >= 2 grid steps so the "parallel" axis can shard across
            # the 2 TensorCores of a v7x chip.
            half = -(-((rows + 1) // 2) // granule) * granule
            return min(half, rows)
        return rows                      # single full-extent block (no padding needed)
    return tile


def layer_norm(x, scale, shift, eps=1e-5):
    """LayerNorm over the last dim, affine with scale/shift of shape (D,).
    Matches torch: biased variance, eps inside the sqrt, f32 accumulation."""
    orig_shape = x.shape
    d = orig_shape[-1]
    rows = math.prod(orig_shape[:-1])
    x2 = x.reshape(rows, d)
    scale_f = scale.astype(jnp.float32).reshape(1, d)
    shift_f = shift.astype(jnp.float32).reshape(1, d)
    itemsize = x.dtype.itemsize
    granule = max(8, 32 // itemsize)     # sublane packing: f32=8, bf16=16, 8-bit=32

    # Lane-dense packing for small D (D | 128). Note: if D < 128 but does not
    # divide 128 (or rows % pack != 0) we fall back to the generic path, which
    # is correct but only uses D/128 of the lane width.
    pack = 1
    if d < _LANES and _LANES % d == 0:
        cand = _LANES // d
        if cand <= 16 and rows % cand == 0:
            pack = cand

    if pack > 1:
        d_eff = _LANES
        rows_eff = rows // pack
        x_in = x2.reshape(rows_eff, d_eff)                  # free, row-major contiguous
        scale_in = jnp.tile(scale_f, (1, pack))             # (1, 128)
        shift_in = jnp.tile(shift_f, (1, pack))
        lane = jnp.arange(d_eff, dtype=jnp.int32)
        seg_masks = (lane[None, :] // d ==
                     jnp.arange(pack, dtype=jnp.int32)[:, None]).astype(jnp.float32)
        kernel = functools.partial(_layernorm_packed_kernel,
                                   pack=pack, inv_d=1.0 / d, eps=eps)
        extra_inputs = (seg_masks,)
        extra_specs = [pl.BlockSpec((pack, d_eff), lambda i: (0, 0))]
    else:
        d_eff = d
        rows_eff = rows
        x_in = x2
        scale_in = scale_f
        shift_in = shift_f
        kernel = functools.partial(_layernorm_kernel, inv_d=1.0 / d, eps=eps)
        extra_inputs = ()
        extra_specs = []

    row_bytes = d_eff * itemsize * 2      # one input row + one output row
    tile_rows = _pick_tile_rows(rows_eff, row_bytes, granule)
    grid = (pl.cdiv(rows_eff, tile_rows),)

    cost = pl.CostEstimate(
        flops=10 * rows * d,
        transcendentals=rows,                               # one rsqrt per logical row
        bytes_accessed=2 * rows * d * itemsize + 2 * d * 4,
    )

    out = pl.pallas_call(
        kernel,
        out_shape=jax.ShapeDtypeStruct((rows_eff, d_eff), x.dtype),
        grid_spec=pltpu.PrefetchScalarGridSpec(
            num_scalar_prefetch=0,
            grid=grid,
            in_specs=[
                pl.BlockSpec((tile_rows, d_eff), lambda i: (i, 0)),
                pl.BlockSpec((1, d_eff), lambda i: (0, 0)),
                pl.BlockSpec((1, d_eff), lambda i: (0, 0)),
                *extra_specs,
            ],
            out_specs=pl.BlockSpec((tile_rows, d_eff), lambda i: (i, 0)),
        ),
        compiler_params=pltpu.CompilerParams(
            dimension_semantics=("parallel",),
            vmem_limit_bytes=_VMEM_LIMIT_BYTES,
        ),
        cost_estimate=cost,
    )(x_in, scale_in, shift_in, *extra_inputs)

    return out.reshape(orig_shape)


if __name__ == "__main__":
    # Module shapes: emb_dim = 32; input (batch=2, seq=8, emb_dim=32).
    batch, seq, emb_dim = 2, 8, 32
    key = jax.random.PRNGKey(0)
    x = jax.random.normal(key, (batch, seq, emb_dim), dtype=jnp.float32)
    scale = jnp.ones((emb_dim,), dtype=jnp.float32)   # nn.Parameter(torch.ones(emb_dim))
    shift = jnp.zeros((emb_dim,), dtype=jnp.float32)  # nn.Parameter(torch.zeros(emb_dim))

    def ref_ln(xv, sc, sh, eps=1e-5):
        mean = jnp.mean(xv, axis=-1, keepdims=True)
        var = jnp.mean((xv - mean) ** 2, axis=-1, keepdims=True)
        return (xv - mean) / jnp.sqrt(var + eps) * sc + sh

    out = jax.block_until_ready(layer_norm(x, scale, shift))
    assert jnp.allclose(out, ref_ln(x, scale, shift), atol=1e-5, rtol=1e-5), \
        "lane-packed path mismatch vs reference"

    # Also exercise the generic (D >= 128) path once with a small shape.
    emb2 = 128
    x2 = jax.random.normal(jax.random.PRNGKey(1), (batch, seq, emb2), dtype=jnp.float32)
    scale2 = jax.random.normal(jax.random.PRNGKey(2), (emb2,), dtype=jnp.float32)
    shift2 = jax.random.normal(jax.random.PRNGKey(3), (emb2,), dtype=jnp.float32)
    out2 = jax.block_until_ready(layer_norm(x2, scale2, shift2))
    assert jnp.allclose(out2, ref_ln(x2, scale2, shift2), atol=1e-5, rtol=1e-5), \
        "generic path mismatch vs reference"

    print("KERNEL_OK")
</pallas_src>

<mosaic_0001>
module attributes {stable_mosaic.version = 11 : i64} {
  func.func @_layernorm_packed_kernel(%arg0: i32, %arg1: memref<4x128xf32, #tpu.memory_space<vmem>>, %arg2: memref<1x128xf32, #tpu.memory_space<vmem>>, %arg3: memref<1x128xf32, #tpu.memory_space<vmem>>, %arg4: memref<4x128xf32, #tpu.memory_space<vmem>>, %arg5: memref<4x128xf32, #tpu.memory_space<vmem>>) attributes {dimension_semantics = [#tpu.dimension_semantics<parallel>], iteration_bounds = array<i64: 1>, scalar_prefetch = 0 : i64, scratch_operands = 0 : i64, tpu.core_type = #tpu.core_type<tc>, window_params = [{transform_indices = @transform_0, window_bounds = array<i64: 4, 128>}, {pipeline_mode = #tpu.pipeline_mode<synchronous>, transform_indices = @transform_1, window_bounds = array<i64: 1, 128>}, {pipeline_mode = #tpu.pipeline_mode<synchronous>, transform_indices = @transform_2, window_bounds = array<i64: 1, 128>}, {pipeline_mode = #tpu.pipeline_mode<synchronous>, transform_indices = @transform_3, window_bounds = array<i64: 4, 128>}, {transform_indices = @transform_4, window_bounds = array<i64: 4, 128>}]} {
    %c0 = arith.constant 0 : index
    %c0_0 = arith.constant 0 : index
    %0 = vector.load %arg1[%c0, %c0_0] : memref<4x128xf32, #tpu.memory_space<vmem>>, vector<4x128xf32>
    %c0_1 = arith.constant 0 : index
    %c0_2 = arith.constant 0 : index
    %1 = vector.load %arg4[%c0_1, %c0_2] : memref<4x128xf32, #tpu.memory_space<vmem>>, vector<4x128xf32>
    %cst = arith.constant 0.000000e+00 : f32
    %2 = vector.broadcast %cst : f32 to vector<4x128xf32>
    %3 = vector.extract_strided_slice %1 {offsets = [0, 0], sizes = [1, 128], strides = [1, 1]} : vector<4x128xf32> to vector<1x128xf32>
    %4 = vector.broadcast %3 : vector<1x128xf32> to vector<4x128xf32>
    %5 = arith.mulf %0, %4 : vector<4x128xf32>
    %cst_3 = arith.constant dense<0.000000e+00> : vector<4xf32>
    %6 = vector.multi_reduction <add>, %5, %cst_3 [1] : vector<4x128xf32> to vector<4xf32>
    %7 = vector.shape_cast %6 : vector<4xf32> to vector<4x1xf32>
    %8 = vector.broadcast %7 : vector<4x1xf32> to vector<4x128xf32>
    %9 = vector.broadcast %3 : vector<1x128xf32> to vector<4x128xf32>
    %10 = arith.mulf %8, %9 : vector<4x128xf32>
    %11 = arith.addf %2, %10 : vector<4x128xf32>
    %12 = vector.extract_strided_slice %1 {offsets = [1, 0], sizes = [1, 128], strides = [1, 1]} : vector<4x128xf32> to vector<1x128xf32>
    %13 = vector.broadcast %12 : vector<1x128xf32> to vector<4x128xf32>
    %14 = arith.mulf %0, %13 : vector<4x128xf32>
    %cst_4 = arith.constant dense<0.000000e+00> : vector<4xf32>
    %15 = vector.multi_reduction <add>, %14, %cst_4 [1] : vector<4x128xf32> to vector<4xf32>
    %16 = vector.shape_cast %15 : vector<4xf32> to vector<4x1xf32>
    %17 = vector.broadcast %16 : vector<4x1xf32> to vector<4x128xf32>
    %18 = vector.broadcast %12 : vector<1x128xf32> to vector<4x128xf32>
    %19 = arith.mulf %17, %18 : vector<4x128xf32>
    %20 = arith.addf %11, %19 : vector<4x128xf32>
    %21 = vector.extract_strided_slice %1 {offsets = [2, 0], sizes = [1, 128], strides = [1, 1]} : vector<4x128xf32> to vector<1x128xf32>
    %22 = vector.broadcast %21 : vector<1x128xf32> to vector<4x128xf32>
    %23 = arith.mulf %0, %22 : vector<4x128xf32>
    %cst_5 = arith.constant dense<0.000000e+00> : vector<4xf32>
    %24 = vector.multi_reduction <add>, %23, %cst_5 [1] : vector<4x128xf32> to vector<4xf32>
    %25 = vector.shape_cast %24 : vector<4xf32> to vector<4x1xf32>
    %26 = vector.broadcast %25 : vector<4x1xf32> to vector<4x128xf32>
    %27 = vector.broadcast %21 : vector<1x128xf32> to vector<4x128xf32>
    %28 = arith.mulf %26, %27 : vector<4x128xf32>
    %29 = arith.addf %20, %28 : vector<4x128xf32>
    %30 = vector.extract_strided_slice %1 {offsets = [3, 0], sizes = [1, 128], strides = [1, 1]} : vector<4x128xf32> to vector<1x128xf32>
    %31 = vector.broadcast %30 : vector<1x128xf32> to vector<4x128xf32>
    %32 = arith.mulf %0, %31 : vector<4x128xf32>
    %cst_6 = arith.constant dense<0.000000e+00> : vector<4xf32>
    %33 = vector.multi_reduction <add>, %32, %cst_6 [1] : vector<4x128xf32> to vector<4xf32>
    %34 = vector.shape_cast %33 : vector<4xf32> to vector<4x1xf32>
    %35 = vector.broadcast %34 : vector<4x1xf32> to vector<4x128xf32>
    %36 = vector.broadcast %30 : vector<1x128xf32> to vector<4x128xf32>
    %37 = arith.mulf %35, %36 : vector<4x128xf32>
    %38 = arith.addf %29, %37 : vector<4x128xf32>
    %cst_7 = arith.constant 3.125000e-02 : f32
    %39 = vector.broadcast %cst_7 : f32 to vector<4x128xf32>
    %40 = arith.mulf %38, %39 : vector<4x128xf32>
    %41 = arith.subf %0, %40 : vector<4x128xf32>
    %42 = arith.mulf %41, %41 : vector<4x128xf32>
    %cst_8 = arith.constant 0.000000e+00 : f32
    %43 = vector.broadcast %cst_8 : f32 to vector<4x128xf32>
    %44 = vector.extract_strided_slice %1 {offsets = [0, 0], sizes = [1, 128], strides = [1, 1]} : vector<4x128xf32> to vector<1x128xf32>
    %45 = vector.broadcast %44 : vector<1x128xf32> to vector<4x128xf32>
    %46 = arith.mulf %42, %45 : vector<4x128xf32>
    %cst_9 = arith.constant dense<0.000000e+00> : vector<4xf32>
    %47 = vector.multi_reduction <add>, %46, %cst_9 [1] : vector<4x128xf32> to vector<4xf32>
    %48 = vector.shape_cast %47 : vector<4xf32> to vector<4x1xf32>
    %49 = vector.broadcast %48 : vector<4x1xf32> to vector<4x128xf32>
    %50 = vector.broadcast %44 : vector<1x128xf32> to vector<4x128xf32>
    %51 = arith.mulf %49, %50 : vector<4x128xf32>
    %52 = arith.addf %43, %51 : vector<4x128xf32>
    %53 = vector.extract_strided_slice %1 {offsets = [1, 0], sizes = [1, 128], strides = [1, 1]} : vector<4x128xf32> to vector<1x128xf32>
    %54 = vector.broadcast %53 : vector<1x128xf32> to vector<4x128xf32>
    %55 = arith.mulf %42, %54 : vector<4x128xf32>
    %cst_10 = arith.constant dense<0.000000e+00> : vector<4xf32>
    %56 = vector.multi_reduction <add>, %55, %cst_10 [1] : vector<4x128xf32> to vector<4xf32>
    %57 = vector.shape_cast %56 : vector<4xf32> to vector<4x1xf32>
    %58 = vector.broadcast %57 : vector<4x1xf32> to vector<4x128xf32>
    %59 = vector.broadcast %53 : vector<1x128xf32> to vector<4x128xf32>
    %60 = arith.mulf %58, %59 : vector<4x128xf32>
    %61 = arith.addf %52, %60 : vector<4x128xf32>
    %62 = vector.extract_strided_slice %1 {offsets = [2, 0], sizes = [1, 128], strides = [1, 1]} : vector<4x128xf32> to vector<1x128xf32>
    %63 = vector.broadcast %62 : vector<1x128xf32> to vector<4x128xf32>
    %64 = arith.mulf %42, %63 : vector<4x128xf32>
    %cst_11 = arith.constant dense<0.000000e+00> : vector<4xf32>
    %65 = vector.multi_reduction <add>, %64, %cst_11 [1] : vector<4x128xf32> to vector<4xf32>
    %66 = vector.shape_cast %65 : vector<4xf32> to vector<4x1xf32>
    %67 = vector.broadcast %66 : vector<4x1xf32> to vector<4x128xf32>
    %68 = vector.broadcast %62 : vector<1x128xf32> to vector<4x128xf32>
    %69 = arith.mulf %67, %68 : vector<4x128xf32>
    %70 = arith.addf %61, %69 : vector<4x128xf32>
    %71 = vector.extract_strided_slice %1 {offsets = [3, 0], sizes = [1, 128], strides = [1, 1]} : vector<4x128xf32> to vector<1x128xf32>
    %72 = vector.broadcast %71 : vector<1x128xf32> to vector<4x128xf32>
    %73 = arith.mulf %42, %72 : vector<4x128xf32>
    %cst_12 = arith.constant dense<0.000000e+00> : vector<4xf32>
    %74 = vector.multi_reduction <add>, %73, %cst_12 [1] : vector<4x128xf32> to vector<4xf32>
    %75 = vector.shape_cast %74 : vector<4xf32> to vector<4x1xf32>
    %76 = vector.broadcast %75 : vector<4x1xf32> to vector<4x128xf32>
    %77 = vector.broadcast %71 : vector<1x128xf32> to vector<4x128xf32>
    %78 = arith.mulf %76, %77 : vector<4x128xf32>
    %79 = arith.addf %70, %78 : vector<4x128xf32>
    %cst_13 = arith.constant 3.125000e-02 : f32
    %80 = vector.broadcast %cst_13 : f32 to vector<4x128xf32>
    %81 = arith.mulf %79, %80 : vector<4x128xf32>
    %cst_14 = arith.constant 9.99999974E-6 : f32
    %82 = vector.broadcast %cst_14 : f32 to vector<4x128xf32>
    %83 = arith.addf %81, %82 : vector<4x128xf32>
    %84 = math.rsqrt %83 : vector<4x128xf32>
    %85 = arith.mulf %41, %84 : vector<4x128xf32>
    %c0_15 = arith.constant 0 : index
    %c0_16 = arith.constant 0 : index
    %86 = vector.load %arg2[%c0_15, %c0_16] : memref<1x128xf32, #tpu.memory_space<vmem>>, vector<1x128xf32>
    %87 = vector.broadcast %86 : vector<1x128xf32> to vector<4x128xf32>
    %88 = arith.mulf %85, %87 : vector<4x128xf32>
    %c0_17 = arith.constant 0 : index
    %c0_18 = arith.constant 0 : index
    %89 = vector.load %arg3[%c0_17, %c0_18] : memref<1x128xf32, #tpu.memory_space<vmem>>, vector<1x128xf32>
    %90 = vector.broadcast %89 : vector<1x128xf32> to vector<4x128xf32>
    %91 = arith.addf %88, %90 : vector<4x128xf32>
    %c0_19 = arith.constant 0 : index
    %c0_20 = arith.constant 0 : index
    %92 = vector.load %arg5[%c0_19, %c0_20] : memref<4x128xf32, #tpu.memory_space<vmem>>, vector<4x128xf32>
    tpu.vector_store %arg5[%c0_19, %c0_20], %91 {strides = array<i32>} : memref<4x128xf32, #tpu.memory_space<vmem>>, vector<4x128xf32>,
    return
  }
  func.func @transform_0(%arg0: i32) -> (i32, i32) {
    %c0_i32 = arith.constant 0 : i32
    %c0_i32_0 = arith.constant 0 : i32
    return %arg0, %c0_i32 : i32, i32
  }
  func.func @transform_1(%arg0: i32) -> (i32, i32) {
    %c0_i32 = arith.constant 0 : i32
    %c0_i32_0 = arith.constant 0 : i32
    %c0_i32_1 = arith.constant 0 : i32
    return %c0_i32, %c0_i32_0 : i32, i32
  }
  func.func @transform_2(%arg0: i32) -> (i32, i32) {
    %c0_i32 = arith.constant 0 : i32
    %c0_i32_0 = arith.constant 0 : i32
    %c0_i32_1 = arith.constant 0 : i32
    return %c0_i32, %c0_i32_0 : i32, i32
  }
  func.func @transform_3(%arg0: i32) -> (i32, i32) {
    %c0_i32 = arith.constant 0 : i32
    %c0_i32_0 = arith.constant 0 : i32
    %c0_i32_1 = arith.constant 0 : i32
    return %c0_i32, %c0_i32_0 : i32, i32
  }
  func.func @transform_4(%arg0: i32) -> (i32, i32) {
    %c0_i32 = arith.constant 0 : i32
    %c0_i32_0 = arith.constant 0 : i32
    return %arg0, %c0_i32 : i32, i32
  }
}

</mosaic_0001>

<llo_original>
// kernel: tpu_custom_call.1
$region0: #{tpu_custom_call.1}
  #allocation0 [shape = 'u32[]', space=smem, size = 0x4, offset = 0x4, fixed_abs, tag = 'smem constant byte address 0x4 - core index']
  #allocation1 [shape = 'u32[144,128]{1,0:T(1,128)}', space=vmem, size = 0x12000, scoped, tag = 'internal scratch']
  %s0 = inlined_call_operand.hbm [shape: f32[4,128], index: 0, kind: input, shape index: {}]
  %s1 = inlined_call_operand.vmem [shape: f32[1,128], index: 1, kind: input, shape index: {}]
  %s2 = inlined_call_operand.vmem [shape: f32[1,128], index: 2, kind: input, shape index: {}]
  %s3 = inlined_call_operand.vmem [shape: f32[4,128], index: 3, kind: input, shape index: {}]
  %s4 = inlined_call_operand.hbm [shape: f32[4,128], index: 4, kind: output, shape index: {}]
  %s5 = sld [smem:[#allocation0]]
  $region30: #{tpu_custom_call.1} parent=0
    _
  %s7 = ssub.s32 1, %s5
  %s8 = scalar_select 0, %s7, %s5
  $region1: #{tpu_custom_call.1} parent=0
    #allocation2 [shape = 'u8[2048]{0}', space=vmem, size = 0x800, scoped, tag = 'input window, operand 0, single buffered']
    #allocation3 [shape = 's32[1]{0}', space=sflag, size = 0x4, scoped, tag = 'scoped memory for tpu_custom_call.1']
    #allocation4 [shape = 's32[1]{0}', space=sflag, size = 0x4, scoped, tag = 'scoped memory for tpu_custom_call.1']
    #allocation5 [shape = 'u8[2048]{0}', space=vmem, size = 0x800, scoped, tag = 'output window, operand 0, single buffered']
    %9 = vsyncpa [#allocation3], 0
    %10 = vsyncpa [#allocation4], 0
    // Predicated region
    $region2: #{tpu_custom_call.1} parent=1 // pred_check
      _
    $region3: #{tpu_custom_call.1} parent=1 // pred_check_branch
      %12 = sbr.rel (0) target = $region5
    $region4: #{tpu_custom_call.1} parent=1 // pred_region
      %s14 = ssub.s32 64, 64
      %15 = vsyncadd [#allocation3], %s14
      %s17 = sshll.u32 [#allocation2], 4
      %s18 = int_to_ptr.vmem [resolvable:$true] %s17
      %20 = dma.hbm_to_vmem [thread:$0]  %s0, 64, %s18, [#allocation3]
    $region5: #{tpu_custom_call.1} parent=1 // pred_fallthru
      _
    // Predicated region
    $region6: #{tpu_custom_call.1} parent=1 // pred_check
      _
    $region7: #{tpu_custom_call.1} parent=1 // pred_check_branch
      %22 = sbr.rel (0) target = $region9
    $region8: #{tpu_custom_call.1} parent=1 // pred_region
      _
    $region9: #{tpu_custom_call.1} parent=1 // pred_fallthru
      _
    // Predicated region
    $region10: #{tpu_custom_call.1} parent=1 // pred_check
      _
    $region11: #{tpu_custom_call.1} parent=1 // pred_check_branch
      %24 = sbr.rel (0) target = $region13
    $region12: #{tpu_custom_call.1} parent=1 // pred_region
      _
    $region13: #{tpu_custom_call.1} parent=1 // pred_fallthru
      _
    // Predicated region
    $region14: #{tpu_custom_call.1} parent=1 // pred_check
      _
    $region15: #{tpu_custom_call.1} parent=1 // pred_check_branch
      %26 = sbr.rel (0) target = $region17
    $region16: #{tpu_custom_call.1} parent=1 // pred_region
      _
    $region17: #{tpu_custom_call.1} parent=1 // pred_fallthru
      _
    // Predicated region
    $region18: #{tpu_custom_call.1} parent=1 // pred_check
      _
    $region19: #{tpu_custom_call.1} parent=1 // pred_check_branch
      %28 = sbr.rel (0) target = $region21
    $region20: #{tpu_custom_call.1} parent=1 // pred_region
      %29 = dma.done [#allocation3], 64
    $region21: #{tpu_custom_call.1} parent=1 // pred_fallthru
      _
    %v30 = vld [vmem:[#allocation2] sm:$0xf]
    %v31 = vld [vmem:[%s3] sm:$0xf]
    %v32 = vlaneseq
    %v33 = vshrl.u32 %v32, 7
    %v34 = vsub.s32 0, %v33
    %v35 = vrot.slane %v31, %v34
    %v36 = vmul.f32 %v30, %v35
    %vm37 = vcmask 1043456
    %v38 = vsel %vm37, %v36, 0.0
    %39 = vadd.xlane.f32.xlu0 %v38
    %v40 = vpop.xlane.xlu0 %39
    %v41 = vmul.f32 %v40, %v35
    %v42 = vadd.f32 %v41, 0.0
    %v43 = vlaneseq
    %v44 = vshrl.u32 %v43, 7
    %v45 = vsub.s32 1, %v44
    %v46 = vrot.slane %v31, %v45
    %v47 = vmul.f32 %v30, %v46
    %v48 = vsel %vm37, %v47, 0.0
    %49 = vadd.xlane.f32.xlu0 %v48
    %v50 = vpop.xlane.xlu0 %49
    %v51 = vmul.f32 %v50, %v46
    %v52 = vadd.f32 %v42, %v51
    %v53 = vlaneseq
    %v54 = vshrl.u32 %v53, 7
    %v55 = vsub.s32 2, %v54
    %v56 = vrot.slane %v31, %v55
    %v57 = vmul.f32 %v30, %v56
    %v58 = vsel %vm37, %v57, 0.0
    %59 = vadd.xlane.f32.xlu0 %v58
    %v60 = vpop.xlane.xlu0 %59
    %v61 = vmul.f32 %v60, %v56
    %v62 = vadd.f32 %v52, %v61
    %v63 = vlaneseq
    %v64 = vshrl.u32 %v63, 7
    %v65 = vsub.s32 3, %v64
    %v66 = vrot.slane %v31, %v65
    %v67 = vmul.f32 %v30, %v66
    %v68 = vsel %vm37, %v67, 0.0
    %69 = vadd.xlane.f32.xlu0 %v68
    %v70 = vpop.xlane.xlu0 %69
    %v71 = vmul.f32 %v70, %v66
    %v72 = vadd.f32 %v62, %v71
    %v73 = vmul.f32 %v72, 0.03125
    %v74 = vsub.f32 %v30, %v73
    %v75 = vmul.f32 %v74, %v74
    %v76 = vmul.f32 %v75, %v35
    %v77 = vsel %vm37, %v76, 0.0
    %78 = vadd.xlane.f32.xlu0 %v77
    %v79 = vpop.xlane.xlu0 %78
    %v80 = vmul.f32 %v79, %v35
    %v81 = vadd.f32 %v80, 0.0
    %v82 = vmul.f32 %v75, %v46
    %v83 = vsel %vm37, %v82, 0.0
    %84 = vadd.xlane.f32.xlu0 %v83
    %v85 = vpop.xlane.xlu0 %84
    %v86 = vmul.f32 %v85, %v46
    %v87 = vadd.f32 %v81, %v86
    %v88 = vmul.f32 %v75, %v56
    %v89 = vsel %vm37, %v88, 0.0
    %90 = vadd.xlane.f32.xlu0 %v89
    %v91 = vpop.xlane.xlu0 %90
    %v92 = vmul.f32 %v91, %v56
    %v93 = vadd.f32 %v87, %v92
    %v94 = vmul.f32 %v75, %v66
    %v95 = vsel %vm37, %v94, 0.0
    %96 = vadd.xlane.f32.xlu0 %v95
    %v97 = vpop.xlane.xlu0 %96
    %v98 = vmul.f32 %v97, %v66
    %v99 = vadd.f32 %v93, %v98
    %v100 = vmul.f32 %v99, 0.03125
    %v101 = vadd.f32 %v100, 1e-05
    %v102 = vrsqrt.pop %v101
    %v103 = vmul.f32 %v74, %v102
    %v104 = vld [vmem:[%s1] sm:$0x1]
    %v106 = vlaneseq
    %v107 = vshrl.u32 %v106, 7
    %v108 = vsub.s32 0, %v107
    %v109 = vrot.slane %v104, %v108
    %v111 = vmul.f32 %v103, %v109
    %v112 = vld [vmem:[%s2] sm:$0x1]
    %v114 = vlaneseq
    %v115 = vshrl.u32 %v114, 7
    %v116 = vsub.s32 0, %v115
    %v117 = vrot.slane %v112, %v116
    %v119 = vadd.f32 %v111, %v117
    %120 = vst [vmem:[#allocation5] sm:$0xf] %v119
    // Predicated region
    $region22: #{tpu_custom_call.1} parent=1 // pred_check
      _
    $region23: #{tpu_custom_call.1} parent=1 // pred_check_branch
      %122 = sbr.rel (0) target = $region25
    $region24: #{tpu_custom_call.1} parent=1 // pred_region
      %s124 = ssub.s32 64, 64
      %125 = vsyncadd [#allocation4], %s124
      %s127 = sshll.u32 [#allocation5], 4
      %s128 = int_to_ptr.vmem [resolvable:$true] %s127
      %130 = dma.vmem_to_hbm [thread:$0]  %s128, 64, %s4, [#allocation4]
    $region25: #{tpu_custom_call.1} parent=1 // pred_fallthru
      _
    // Predicated region
    $region26: #{tpu_custom_call.1} parent=1 // pred_check
      _
    $region27: #{tpu_custom_call.1} parent=1 // pred_check_branch
      %132 = sbr.rel (0) target = $region29
    $region28: #{tpu_custom_call.1} parent=1 // pred_region
      %133 = dma.done [#allocation4], 64
    $region29: #{tpu_custom_call.1} parent=1 // pred_fallthru
      _
    %134 = vsyncpa [#allocation3], 1
    %135 = vsyncpa [#allocation4], 1

</llo_original>
